<compile_context>
chip_gen: v6e
topology: v6e:2x2x1
jax: 0.10.0
libtpu: 0.0.40
codegen_flags: <defaults>
</compile_context>

<pallas_src>
import jax
import jax.numpy as jnp
from jax import lax
from jax.experimental import pallas as pl
from jax.experimental.pallas import tpu as pltpu

BN_EPS = 1e-5
LRELU_SLOPE = 0.1
VMEM_LIMIT_BYTES = 32 * 1024 * 1024


def _stats_kernel(x_ref, s_ref, g_ref):
    """Pass 1: per-image-block partial sums of x and of the Gram matrix x x^T.

    x_ref: (Nb, C1, T)   HW-tile of Nb images (NCHW view, lane axis = HW)
    s_ref: (1, C1, 1)    partial  sum_t x      (resident across the HW axis)
    g_ref: (1, C1, C1)   partial  sum_t x x^T
    """
    @pl.when(pl.program_id(1) == 0)
    def _():
        s_ref[...] = jnp.zeros_like(s_ref)
        g_ref[...] = jnp.zeros_like(g_ref)

    nb, c1, _ = x_ref.shape
    s = jnp.zeros((c1, 1), jnp.float32)
    g = jnp.zeros((c1, c1), jnp.float32)
    for b in range(nb):                         # static unroll over the N block
        xb = x_ref[b].astype(jnp.float32)       # (C1, T)
        s = s + jnp.sum(xb, axis=1, keepdims=True)
        g = g + lax.dot_general(xb, xb, (((1,), (1,)), ((), ())),
                                preferred_element_type=jnp.float32)
    s_ref[0] += s
    g_ref[0] += g


def _apply_kernel(x_ref, wf_ref, shift_ref, o_ref):
    """Pass 2: z = (scale-folded W) @ x + shift; LeakyReLU(0.1).

    x_ref:     (Nb, C1, T)
    wf_ref:    (C2, C1)     conv weight with BN scale folded in
    shift_ref: (C2, 1)      beta - mean * scale
    o_ref:     (Nb, C2, T)  NCHW output tile, lane axis = HW (multiple of 128)
    """
    wf = wf_ref[...].astype(jnp.float32)
    shift = shift_ref[...]
    for b in range(x_ref.shape[0]):             # static unroll over the N block
        y = jnp.dot(wf, x_ref[b].astype(jnp.float32),
                    preferred_element_type=jnp.float32)          # (C2, T)
        z = y + shift
        o_ref[b] = jnp.where(z >= 0.0, z, LRELU_SLOPE * z).astype(o_ref.dtype)


def _choose_tiling(n, c1, c2, hw, itemsize=4):
    """Pick (Nb, T, HW_pad): lane-dense, >= ~2 MiB per step, within VMEM budget."""
    try:
        vmem_cap = pltpu.get_tpu_info().vmem_capacity_bytes
    except Exception:
        vmem_cap = 64 * 1024 * 1024             # v7x (most restrictive) fallback
    budget = min(vmem_cap // 3, 24 * 1024 * 1024)
    target = 2 * 1024 * 1024                    # bytes moved per grid step
    per_col = itemsize * (c1 + c2)              # x read + out write per column

    hw128 = -(-hw // 128) * 128                 # lane-dense HW extent
    t_cap = max(128, (budget // (2 * per_col)) // 128 * 128)
    t = min(hw128, t_cap)
    n_hw = -(-hw128 // t)
    hw_pad = n_hw * t

    nb = 1
    if n_hw == 1:                               # whole image per step -> block over N
        while (nb < min(n, 32) and n % (2 * nb) == 0
               and 2 * (2 * nb) * per_col * t <= budget
               and nb * per_col * t < target):
            nb *= 2
    return nb, t, hw_pad


def conv_forward(x_nchw, weight, gamma, beta):
    """x_nchw: (N, C1, H, W); weight: (C2, C1, 1, 1); gamma/beta: (C2,)."""
    N, C1, H, W = x_nchw.shape
    C2 = weight.shape[0]
    HW = H * W
    M = N * HW                                  # true element count for BN stats

    nb, T, hw_pad = _choose_tiling(N, C1, C2, HW)
    n_hw = hw_pad // T

    x3d = x_nchw.reshape(N, C1, HW)             # NCHW view, no data movement
    if hw_pad != HW:
        # Zero columns contribute 0 to both s and G, and M uses the true HW, so
        # padding keeps the BN statistics exact while keeping stores lane-dense.
        x3d = jnp.pad(x3d, ((0, 0), (0, 0), (0, hw_pad - HW)))
    w2d = weight[:, :, 0, 0].astype(jnp.float32)                 # (C2, C1)

    # ---- Pass 1: per-image-block partial sums of x and x x^T ----------------
    s_part, g_part = pl.pallas_call(
        _stats_kernel,
        out_shape=(jax.ShapeDtypeStruct((N // nb, C1, 1), jnp.float32),
                   jax.ShapeDtypeStruct((N // nb, C1, C1), jnp.float32)),
        grid_spec=pltpu.PrefetchScalarGridSpec(
            num_scalar_prefetch=0,
            grid=(N // nb, n_hw),
            in_specs=[pl.BlockSpec((nb, C1, T), lambda i, j: (i, 0, j))],
            out_specs=[pl.BlockSpec((1, C1, 1), lambda i, j: (i, 0, 0)),
                       pl.BlockSpec((1, C1, C1), lambda i, j: (i, 0, 0))]),
        compiler_params=pltpu.CompilerParams(
            dimension_semantics=("parallel", "arbitrary"),
            vmem_limit_bytes=VMEM_LIMIT_BYTES),
    )(x3d)

    # ---- Fold BN (batch stats, biased variance) into the conv weight --------
    s = jnp.sum(s_part, axis=0)                                   # (C1, 1)
    G = jnp.sum(g_part, axis=0)                                   # (C1, C1)
    sum_y = w2d @ s                                               # (C2, 1)
    sumsq_y = jnp.sum((w2d @ G) * w2d, axis=1, keepdims=True)     # diag(W G W^T)
    mean = sum_y / M
    var = jnp.maximum(sumsq_y / M - mean * mean, 0.0)             # guard cancellation
    scale = gamma.reshape(C2, 1) * lax.rsqrt(var + BN_EPS)
    shift = beta.reshape(C2, 1) - mean * scale
    w_folded = w2d * scale                                        # (C2, C1)

    # ---- Pass 2: folded conv + shift + LeakyReLU, fully parallel ------------
    out3d = pl.pallas_call(
        _apply_kernel,
        out_shape=jax.ShapeDtypeStruct((N, C2, hw_pad), x_nchw.dtype),
        grid_spec=pltpu.PrefetchScalarGridSpec(
            num_scalar_prefetch=0,
            grid=(N // nb, n_hw),
            in_specs=[pl.BlockSpec((nb, C1, T), lambda i, j: (i, 0, j)),
                      pl.BlockSpec((C2, C1), lambda i, j: (0, 0)),
                      pl.BlockSpec((C2, 1), lambda i, j: (0, 0))],
            out_specs=pl.BlockSpec((nb, C2, T), lambda i, j: (i, 0, j))),
        compiler_params=pltpu.CompilerParams(
            dimension_semantics=("parallel", "parallel"),
            vmem_limit_bytes=VMEM_LIMIT_BYTES),
    )(x3d, w_folded, shift)

    # (N, C2, HW_pad) -> slice off padding -> (N, C2, H, W): pure reshape (NCHW).
    return out3d[:, :, :HW].reshape(N, C2, H, W)


if __name__ == "__main__":
    # Module instantiation: Conv(c1=4, c2=8) with defaults k=1, p=0, s=1, act='lrelu'
    N, C1, H, W = 2, 4, 16, 16
    C2 = 8

    key = jax.random.PRNGKey(0)
    kx, kw = jax.random.split(key)
    x = jax.random.normal(kx, (N, C1, H, W), dtype=jnp.float32)

    # Conv2d weight (c2, c1, 1, 1), no bias; BN gamma=1, beta=0 (PyTorch default init).
    fan_in = C1 * 1 * 1
    bound = 1.0 / (fan_in ** 0.5)
    weight = jax.random.uniform(kw, (C2, C1, 1, 1), jnp.float32, -bound, bound)
    gamma = jnp.ones((C2,), jnp.float32)
    beta = jnp.zeros((C2,), jnp.float32)

    out = conv_forward(x, weight, gamma, beta)
    jax.block_until_ready(out)

    # Pure-JAX reference (same math, NCHW throughout) — cheap sanity assert.
    y = jnp.einsum('oc,nchw->nohw', weight[:, :, 0, 0], x)
    mean = y.mean(axis=(0, 2, 3), keepdims=True)
    var = ((y - mean) ** 2).mean(axis=(0, 2, 3), keepdims=True)
    z = (y - mean) / jnp.sqrt(var + BN_EPS)
    z = z * gamma.reshape(1, C2, 1, 1) + beta.reshape(1, C2, 1, 1)
    ref = jnp.where(z >= 0, z, LRELU_SLOPE * z)
    assert jnp.allclose(out, ref, atol=1e-4, rtol=1e-4), "mismatch vs reference"

    print("KERNEL_OK")
</pallas_src>

<mosaic_0001>
module attributes {stable_mosaic.version = 11 : i64} {
  func.func @_stats_kernel(%arg0: i32, %arg1: i32, %arg2: memref<2x4x256xf32, #tpu.memory_space<vmem>>, %arg3: memref<1x4x1xf32, #tpu.memory_space<vmem>>, %arg4: memref<1x4x4xf32, #tpu.memory_space<vmem>>) attributes {dimension_semantics = [#tpu.dimension_semantics<parallel>, #tpu.dimension_semantics<arbitrary>], iteration_bounds = array<i64: 1, 1>, scalar_prefetch = 0 : i64, scratch_operands = 0 : i64, tpu.core_type = #tpu.core_type<tc>, window_params = [{transform_indices = @transform_0, window_bounds = array<i64: 2, 4, 256>}, {transform_indices = @transform_1, window_bounds = array<i64: 1, 4, 1>}, {transform_indices = @transform_2, window_bounds = array<i64: 1, 4, 4>}]} {
    %c0_i32 = arith.constant 0 : i32
    %0 = arith.cmpi eq, %arg1, %c0_i32 : i32
    %1 = arith.extui %0 : i1 to i32
    %c0_i32_0 = arith.constant 0 : i32
    %2 = arith.cmpi ne, %1, %c0_i32_0 : i32
    scf.if %2 {
      %cst_22 = arith.constant 0.000000e+00 : f32
      %31 = vector.broadcast %cst_22 : f32 to vector<1x4x1xf32>
      %c0_23 = arith.constant 0 : index
      %c0_24 = arith.constant 0 : index
      %c0_25 = arith.constant 0 : index
      %32 = vector.load %arg3[%c0_23, %c0_24, %c0_25] : memref<1x4x1xf32, #tpu.memory_space<vmem>>, vector<1x4x1xf32>
      tpu.vector_store %arg3[%c0_23, %c0_24, %c0_25], %31 {strides = array<i32>} : memref<1x4x1xf32, #tpu.memory_space<vmem>>, vector<1x4x1xf32>,
      %cst_26 = arith.constant 0.000000e+00 : f32
      %33 = vector.broadcast %cst_26 : f32 to vector<1x4x4xf32>
      %c0_27 = arith.constant 0 : index
      %c0_28 = arith.constant 0 : index
      %c0_29 = arith.constant 0 : index
      %34 = vector.load %arg4[%c0_27, %c0_28, %c0_29] : memref<1x4x4xf32, #tpu.memory_space<vmem>>, vector<1x4x4xf32>
      tpu.vector_store %arg4[%c0_27, %c0_28, %c0_29], %33 {strides = array<i32>} : memref<1x4x4xf32, #tpu.memory_space<vmem>>, vector<1x4x4xf32>,
    } else {
    }
    %cst = arith.constant 0.000000e+00 : f32
    %3 = vector.broadcast %cst : f32 to vector<4x1xf32>
    %cst_1 = arith.constant 0.000000e+00 : f32
    %4 = vector.broadcast %cst_1 : f32 to vector<4x4xf32>
    %c0 = arith.constant 0 : index
    %c0_2 = arith.constant 0 : index
    %c0_3 = arith.constant 0 : index
    %5 = vector.load %arg2[%c0, %c0_2, %c0_3] : memref<2x4x256xf32, #tpu.memory_space<vmem>>, vector<1x4x256xf32>
    %6 = vector.shape_cast %5 : vector<1x4x256xf32> to vector<4x256xf32>
    %cst_4 = arith.constant dense<0.000000e+00> : vector<4xf32>
    %7 = vector.multi_reduction <add>, %6, %cst_4 [1] : vector<4x256xf32> to vector<4xf32>
    %8 = vector.shape_cast %7 : vector<4xf32> to vector<4x1xf32>
    %9 = arith.addf %3, %8 : vector<4x1xf32>
    %cst_5 = arith.constant dense<0.000000e+00> : vector<4x4xf32>
    %10 = tpu.matmul %6, %6, %cst_5 {dimension_numbers = #tpu.dot_dimension_numbers<[1], [1], [0], [0], [0, 0, 1, 0], [], []>} : vector<4x256xf32>, vector<4x256xf32>, vector<4x4xf32> -> vector<4x4xf32>
    %11 = arith.addf %4, %10 : vector<4x4xf32>
    %c1 = arith.constant 1 : index
    %c0_6 = arith.constant 0 : index
    %c0_7 = arith.constant 0 : index
    %12 = vector.load %arg2[%c1, %c0_6, %c0_7] : memref<2x4x256xf32, #tpu.memory_space<vmem>>, vector<1x4x256xf32>
    %13 = vector.shape_cast %12 : vector<1x4x256xf32> to vector<4x256xf32>
    %cst_8 = arith.constant dense<0.000000e+00> : vector<4xf32>
    %14 = vector.multi_reduction <add>, %13, %cst_8 [1] : vector<4x256xf32> to vector<4xf32>
    %15 = vector.shape_cast %14 : vector<4xf32> to vector<4x1xf32>
    %16 = arith.addf %9, %15 : vector<4x1xf32>
    %cst_9 = arith.constant dense<0.000000e+00> : vector<4x4xf32>
    %17 = tpu.matmul %13, %13, %cst_9 {dimension_numbers = #tpu.dot_dimension_numbers<[1], [1], [0], [0], [0, 0, 1, 0], [], []>} : vector<4x256xf32>, vector<4x256xf32>, vector<4x4xf32> -> vector<4x4xf32>
    %18 = arith.addf %11, %17 : vector<4x4xf32>
    %c0_10 = arith.constant 0 : index
    %c0_11 = arith.constant 0 : index
    %c0_12 = arith.constant 0 : index
    %19 = vector.load %arg3[%c0_10, %c0_11, %c0_12] : memref<1x4x1xf32, #tpu.memory_space<vmem>>, vector<1x4x1xf32>
    %20 = vector.shape_cast %19 : vector<1x4x1xf32> to vector<4x1xf32>
    %21 = arith.addf %20, %16 : vector<4x1xf32>
    %c0_13 = arith.constant 0 : index
    %c0_14 = arith.constant 0 : index
    %c0_15 = arith.constant 0 : index
    %22 = vector.load %arg3[%c0_13, %c0_14, %c0_15] : memref<1x4x1xf32, #tpu.memory_space<vmem>>, vector<1x4x1xf32>
    %23 = vector.shape_cast %22 : vector<1x4x1xf32> to vector<4x1xf32>
    %24 = vector.shape_cast %21 : vector<4x1xf32> to vector<1x4x1xf32>
    tpu.vector_store %arg3[%c0_13, %c0_14, %c0_15], %24 {strides = array<i32>} : memref<1x4x1xf32, #tpu.memory_space<vmem>>, vector<1x4x1xf32>,
    %c0_16 = arith.constant 0 : index
    %c0_17 = arith.constant 0 : index
    %c0_18 = arith.constant 0 : index
    %25 = vector.load %arg4[%c0_16, %c0_17, %c0_18] : memref<1x4x4xf32, #tpu.memory_space<vmem>>, vector<1x4x4xf32>
    %26 = vector.shape_cast %25 : vector<1x4x4xf32> to vector<4x4xf32>
    %27 = arith.addf %26, %18 : vector<4x4xf32>
    %c0_19 = arith.constant 0 : index
    %c0_20 = arith.constant 0 : index
    %c0_21 = arith.constant 0 : index
    %28 = vector.load %arg4[%c0_19, %c0_20, %c0_21] : memref<1x4x4xf32, #tpu.memory_space<vmem>>, vector<1x4x4xf32>
    %29 = vector.shape_cast %28 : vector<1x4x4xf32> to vector<4x4xf32>
    %30 = vector.shape_cast %27 : vector<4x4xf32> to vector<1x4x4xf32>
    tpu.vector_store %arg4[%c0_19, %c0_20, %c0_21], %30 {strides = array<i32>} : memref<1x4x4xf32, #tpu.memory_space<vmem>>, vector<1x4x4xf32>,
    return
  }
  func.func @transform_0(%arg0: i32, %arg1: i32) -> (i32, i32, i32) {
    %c0_i32 = arith.constant 0 : i32
    %c0_i32_0 = arith.constant 0 : i32
    return %arg0, %c0_i32, %arg1 : i32, i32, i32
  }
  func.func @transform_1(%arg0: i32, %arg1: i32) -> (i32, i32, i32) {
    %c0_i32 = arith.constant 0 : i32
    %c0_i32_0 = arith.constant 0 : i32
    %c0_i32_1 = arith.constant 0 : i32
    return %arg0, %c0_i32, %c0_i32_0 : i32, i32, i32
  }
  func.func @transform_2(%arg0: i32, %arg1: i32) -> (i32, i32, i32) {
    %c0_i32 = arith.constant 0 : i32
    %c0_i32_0 = arith.constant 0 : i32
    %c0_i32_1 = arith.constant 0 : i32
    return %arg0, %c0_i32, %c0_i32_0 : i32, i32, i32
  }
}

</mosaic_0001>

<llo_original>
// kernel: tpu_custom_call.1
$region0: #{tpu_custom_call.1}
  #allocation0 [shape = 'u32[]', space=smem, size = 0x4, offset = 0x4, fixed_abs, tag = 'smem constant byte address 0x4 - core index']
  #allocation1 [shape = 'u32[144,128]{1,0:T(1,128)}', space=vmem, size = 0x12000, scoped, tag = 'internal scratch']
  %s0 = inlined_call_operand.hbm [shape: f32[2,4,256], index: 0, kind: input, shape index: {}]
  %s1 = inlined_call_operand.vmem [shape: f32[1,4,1], index: 1, kind: output, shape index: {0}]
  %s2 = inlined_call_operand.hbm [shape: f32[1,4,4], index: 2, kind: output, shape index: {1}]
  %3 = xla_tuple %s1, %s2
  %s4 = sld [smem:[#allocation0]]
  $region30: #{tpu_custom_call.1} parent=0
    _
  %s6 = ssub.s32 1, %s4
  %s7 = scalar_select 0, %s6, %s4
  $region1: #{tpu_custom_call.1} parent=0
    #allocation2 [shape = 'u8[8192]{0}', space=vmem, size = 0x2000, scoped, tag = 'input window, operand 0, single buffered']
    #allocation3 [shape = 's32[1]{0}', space=sflag, size = 0x4, scoped, tag = 'scoped memory for tpu_custom_call.1']
    #allocation4 [shape = 's32[1]{0}', space=sflag, size = 0x4, scoped, tag = 'scoped memory for tpu_custom_call.1']
    #allocation5 [shape = 'u8[2048]{0}', space=vmem, size = 0x800, scoped, tag = 'output window, operand 1, single buffered']
    %8 = vsyncpa [#allocation3], 0
    %9 = vsyncpa [#allocation4], 0
    // Predicated region
    $region2: #{tpu_custom_call.1} parent=1 // pred_check
      _
    $region3: #{tpu_custom_call.1} parent=1 // pred_check_branch
      %11 = sbr.rel (0) target = $region5
    $region4: #{tpu_custom_call.1} parent=1 // pred_region
      %s13 = ssub.s32 256, 256
      %14 = vsyncadd [#allocation3], %s13
      %s15 = sshll.u32 [#allocation2], 4
      %s16 = int_to_ptr.vmem [resolvable:$true] %s15
      %21 = dma.hbm_to_vmem [thread:$0]  %s0, 256, %s16, [#allocation3], 128, 128, 8
    $region5: #{tpu_custom_call.1} parent=1 // pred_fallthru
      _
    // Predicated region
    $region6: #{tpu_custom_call.1} parent=1 // pred_check
      _
    $region7: #{tpu_custom_call.1} parent=1 // pred_check_branch
      %23 = sbr.rel (0) target = $region9
    $region8: #{tpu_custom_call.1} parent=1 // pred_region
      %24 = dma.done [#allocation3], 256
    $region9: #{tpu_custom_call.1} parent=1 // pred_fallthru
      _
    %p25 = scmp.eq.s32.totalorder 0, 0
    // Predicated region
    $region10: #{tpu_custom_call.1} parent=1 // pred_check
      %p26 = pneg %p25
    $region11: #{tpu_custom_call.1} parent=1 // pred_check_branch
      %28 = sbr.rel (%p26) target = $region13
    $region12: #{tpu_custom_call.1} parent=1 // pred_region
      %vm29 = vcmask 3072
      %30 = vst.msk [vmem:[%s1] sm:$0xf] %vm29, 0.0
      %vm31 = vcmask 27648
      %32 = vst.msk [vmem:[#allocation5] sm:$0xf] %vm31, 0.0
    $region13: #{tpu_custom_call.1} parent=1 // pred_fallthru
      _
    %v33 = vld [vmem:[#allocation2] sm:$0xff]
    %v35 = vcombine.high %v33, %v33
    %vm37 = vcmask 1043456
    %v38 = vsel %vm37, %v33, 0.0
    %v39 = vsel %vm37, %v35, 0.0
    %v40 = vadd.f32 %v38, %v39
    %41 = vadd.xlane.f32.xlu0 %v40
    %v42 = vpop.xlane.xlu0 %41
    %v43 = vadd.f32 %v42, 0.0
    %s44 = scalar_lea.vmem [#allocation2], 8
    %v45 = vld [vmem:[%s44] sm:$0xff]
    %v47 = vcombine.high %v45, %v45
    %v49 = vsel %vm37, %v45, 0.0
    %v50 = vsel %vm37, %v47, 0.0
    %v51 = vadd.f32 %v49, %v50
    %52 = vadd.xlane.f32.xlu0 %v51
    %v53 = vpop.xlane.xlu0 %52
    %v54 = vadd.f32 %v43, %v53
    %55 = vmatprep.subr.mxu0 0.0
    %56 = vmatpush1.xpose.msra.mxu0 0.0
    %57 = vmatprep.subr.mxu0 0.0
    %58 = vmatpush1.xpose.msra.mxu0 0.0
    %59 = vmatprep.subr.mxu0 0.0
    %60 = vmatpush1.xpose.msra.mxu0 0.0
    %61 = vmatprep.subr.mxu0 0.0
    %62 = vmatpush1.xpose.msra.mxu0 0.0
    %63 = vmatprep.subr.mxu0 0.0
    %64 = vmatpush1.xpose.msra.mxu0 0.0
    %65 = vmatprep.subr.mxu0 0.0
    %66 = vmatpush1.xpose.msra.mxu0 0.0
    %67 = vmatprep.subr.mxu0 0.0
    %68 = vmatpush1.xpose.msra.mxu0 0.0
    %69 = vmatprep.subr.mxu0 0.0
    %70 = vmatpush1.xpose.msra.mxu0 0.0
    %71 = vmatprep.subr.mxu0 0.0
    %72 = vmatpush1.xpose.msra.mxu0 0.0
    %73 = vmatprep.subr.mxu0 0.0
    %74 = vmatpush1.xpose.msra.mxu0 0.0
    %75 = vmatprep.subr.mxu0 0.0
    %76 = vmatpush1.xpose.msra.mxu0 0.0
    %77 = vmatprep.subr.mxu0 0.0
    %78 = vmatpush1.xpose.msra.mxu0 0.0
    %79 = vmatprep.subr.mxu0 0.0
    %80 = vmatpush1.xpose.msra.mxu0 0.0
    %81 = vmatprep.subr.mxu0 0.0
    %82 = vmatpush1.xpose.msra.mxu0 0.0
    %83 = vmatprep.subr.mxu0 0.0
    %84 = vmatpush1.xpose.msra.mxu0 0.0
    %85 = vmatprep.subr.mxu0 %v47
    %86 = vmatpush1.xpose.msra.mxu0 %v45
    %87 = vmatprep.subr.mxu0 0.0
    %88 = vmatpush2.xpose.msra.mxu0 0.0
    %89 = vmatprep.subr.mxu0 0.0
    %90 = vmatpush2.xpose.msra.mxu0 0.0
    %91 = vmatprep.subr.mxu0 0.0
    %92 = vmatpush2.xpose.msra.mxu0 0.0
    %93 = vmatprep.subr.mxu0 0.0
    %94 = vmatpush2.xpose.msra.mxu0 0.0
    %95 = vmatprep.subr.mxu0 0.0
    %96 = vmatpush2.xpose.msra.mxu0 0.0
    %97 = vmatprep.subr.mxu0 0.0
    %98 = vmatpush2.xpose.msra.mxu0 0.0
    %99 = vmatprep.subr.mxu0 0.0
    %100 = vmatpush2.xpose.msra.mxu0 0.0
    %101 = vmatprep.subr.mxu0 0.0
    %102 = vmatpush2.xpose.msra.mxu0 0.0
    %103 = vmatprep.subr.mxu0 0.0
    %104 = vmatpush2.xpose.msra.mxu0 0.0
    %105 = vmatprep.subr.mxu0 0.0
    %106 = vmatpush2.xpose.msra.mxu0 0.0
    %107 = vmatprep.subr.mxu0 0.0
    %108 = vmatpush2.xpose.msra.mxu0 0.0
    %109 = vmatprep.subr.mxu0 0.0
    %110 = vmatpush2.xpose.msra.mxu0 0.0
    %111 = vmatprep.subr.mxu0 0.0
    %112 = vmatpush2.xpose.msra.mxu0 0.0
    %113 = vmatprep.subr.mxu0 0.0
    %114 = vmatpush2.xpose.msra.mxu0 0.0
    %115 = vmatprep.subr.mxu0 0.0
    %116 = vmatpush2.xpose.msra.mxu0 0.0
    %117 = vmatprep.subr.mxu0 0.0
    %118 = vmatpush2.xpose.msra.mxu0 0.0
    %119 = vmatprep.mubr.f32.mxu0 %v47
    %120 = vmatmul.mubr.f32.gmra.mxu0 %v45
    %v121 = vpop.f32.mrf.mxu0
    %v122 = vadd.f32 0.0, %v121
    %v123 = vpop.f32.mrf.mxu0
    %124 = vdwg.mxu0
    %125 = vmatprep.subr.mxu0 0.0
    %126 = vmatpush1.xpose.msra.mxu0 0.0
    %127 = vmatprep.subr.mxu0 0.0
    %128 = vmatpush1.xpose.msra.mxu0 0.0
    %129 = vmatprep.subr.mxu0 0.0
    %130 = vmatpush1.xpose.msra.mxu0 0.0
    %131 = vmatprep.subr.mxu0 0.0
    %132 = vmatpush1.xpose.msra.mxu0 0.0
    %133 = vmatprep.subr.mxu0 0.0
    %134 = vmatpush1.xpose.msra.mxu0 0.0
    %135 = vmatprep.subr.mxu0 0.0
    %136 = vmatpush1.xpose.msra.mxu0 0.0
    %137 = vmatprep.subr.mxu0 0.0
    %138 = vmatpush1.xpose.msra.mxu0 0.0
    %139 = vmatprep.subr.mxu0 0.0
    %140 = vmatpush1.xpose.msra.mxu0 0.0
    %141 = vmatprep.subr.mxu0 0.0
    %142 = vmatpush1.xpose.msra.mxu0 0.0
    %143 = vmatprep.subr.mxu0 0.0
    %144 = vmatpush1.xpose.msra.mxu0 0.0
    %145 = vmatprep.subr.mxu0 0.0
    %146 = vmatpush1.xpose.msra.mxu0 0.0
    %147 = vmatprep.subr.mxu0 0.0
    %148 = vmatpush1.xpose.msra.mxu0 0.0
    %149 = vmatprep.subr.mxu0 0.0
    %150 = vmatpush1.xpose.msra.mxu0 0.0
    %151 = vmatprep.subr.mxu0 0.0
    %152 = vmatpush1.xpose.msra.mxu0 0.0
    %153 = vmatprep.subr.mxu0 0.0
    %154 = vmatpush1.xpose.msra.mxu0 0.0
    %155 = vmatprep.subr.mxu0 %v35
    %156 = vmatpush1.xpose.msra.mxu0 %v33
    %157 = vmatprep.subr.mxu0 0.0
    %158 = vmatpush2.xpose.msra.mxu0 0.0
    %159 = vmatprep.subr.mxu0 0.0
    %160 = vmatpush2.xpose.msra.mxu0 0.0
    %161 = vmatprep.subr.mxu0 0.0
    %162 = vmatpush2.xpose.msra.mxu0 0.0
    %163 = vmatprep.subr.mxu0 0.0
    %164 = vmatpush2.xpose.msra.mxu0 0.0
    %165 = vmatprep.subr.mxu0 0.0
    %166 = vmatpush2.xpose.msra.mxu0 0.0
    %167 = vmatprep.subr.mxu0 0.0
    %168 = vmatpush2.xpose.msra.mxu0 0.0
    %169 = vmatprep.subr.mxu0 0.0
    %170 = vmatpush2.xpose.msra.mxu0 0.0
    %171 = vmatprep.subr.mxu0 0.0
    %172 = vmatpush2.xpose.msra.mxu0 0.0
    %173 = vmatprep.subr.mxu0 0.0
    %174 = vmatpush2.xpose.msra.mxu0 0.0
    %175 = vmatprep.subr.mxu0 0.0
    %176 = vmatpush2.xpose.msra.mxu0 0.0
    %177 = vmatprep.subr.mxu0 0.0
    %178 = vmatpush2.xpose.msra.mxu0 0.0
    %179 = vmatprep.subr.mxu0 0.0
    %180 = vmatpush2.xpose.msra.mxu0 0.0
    %181 = vmatprep.subr.mxu0 0.0
    %182 = vmatpush2.xpose.msra.mxu0 0.0
    %183 = vmatprep.subr.mxu0 0.0
    %184 = vmatpush2.xpose.msra.mxu0 0.0
    %185 = vmatprep.subr.mxu0 0.0
    %186 = vmatpush2.xpose.msra.mxu0 0.0
    %187 = vmatprep.subr.mxu0 0.0
    %188 = vmatpush2.xpose.msra.mxu0 0.0
    %189 = vmatprep.mubr.f32.mxu0 %v35
    %190 = vmatmul.mubr.f32.gmra.mxu0 %v33
    %v191 = vpop.f32.mrf.mxu0
    %v192 = vadd.f32 %v122, %v191
    %v193 = vpop.f32.mrf.mxu0
    %194 = vdwg.mxu0
    %v195 = vld [vmem:[%s1] sm:$0xf]
    %v196 = vadd.f32 %v195, %v54
    %vm197 = vcmask 3072
    %198 = vst.msk [vmem:[%s1] sm:$0xf] %vm197, %v196
    %v199 = vld [vmem:[#allocation5] sm:$0xf]
    %v200 = vadd.f32 %v199, %v192
    %vm201 = vcmask 27648
    %202 = vst.msk [vmem:[#allocation5] sm:$0xf] %vm201, %v200
    // Predicated region
    $region14: #{tpu_custom_call.1} parent=1 // pred_check
      _
    $region15: #{tpu_custom_call.1} parent=1 // pred_check_branch
      %204 = sbr.rel (0) target = $region17
    $region16: #{tpu_custom_call.1} parent=1 // pred_region
      _
    $region17: #{tpu_custom_call.1} parent=1 // pred_fallthru
      _
    // Predicated region
    $region18: #{tpu_custom_call.1} parent=1 // pred_check
      _
    $region19: #{tpu_custom_call.1} parent=1 // pred_check_branch
      %206 = sbr.rel (0) target = $region21
    $region20: #{tpu_custom_call.1} parent=1 // pred_region
      %s208 = ssub.s32 64, 64
      %209 = vsyncadd [#allocation4], %s208
      %s211 = sshll.u32 [#allocation5], 4
      %s212 = int_to_ptr.vmem [resolvable:$true] %s211
      %214 = dma.vmem_to_hbm [thread:$0]  %s212, 64, %s2, [#allocation4]
    $region21: #{tpu_custom_call.1} parent=1 // pred_fallthru
      _
    // Predicated region
    $region22: #{tpu_custom_call.1} parent=1 // pred_check
      _
    $region23: #{tpu_custom_call.1} parent=1 // pred_check_branch
      %216 = sbr.rel (0) target = $region25
    $region24: #{tpu_custom_call.1} parent=1 // pred_region
      _
    $region25: #{tpu_custom_call.1} parent=1 // pred_fallthru
      _
    // Predicated region
    $region26: #{tpu_custom_call.1} parent=1 // pred_check
      _
    $region27: #{tpu_custom_call.1} parent=1 // pred_check_branch
      %218 = sbr.rel (0) target = $region29
    $region28: #{tpu_custom_call.1} parent=1 // pred_region
      %219 = dma.done [#allocation4], 64
    $region29: #{tpu_custom_call.1} parent=1 // pred_fallthru
      _
    %220 = vsyncpa [#allocation3], 1
    %221 = vsyncpa [#allocation4], 1

</llo_original>
